<compile_context>
chip_gen: v7x
topology: tpu7x:2x2x1
jax: 0.10.0
libtpu: 0.0.40
codegen_flags: <defaults>
</compile_context>

<pallas_src>
import jax
import jax.numpy as jnp
from jax.experimental import pallas as pl
from jax.experimental.pallas import tpu as pltpu


def _round_up(x, m):
    return ((x + m - 1) // m) * m


def encoder_kernel(x_ref,
                   w1_ref, b1_ref,
                   w2_ref, b2_ref,
                   wh_ref, bh_ref,
                   mean_ref, std_ref):
    """Fused VAE-encoder MLP for one batch tile.

    x arrives in f32 and is cast to bf16 on the VPU right before each MXU push;
    weights are pre-cast bf16 (MXU-native); biases and all post-matmul
    elementwise work stay f32 with f32 MXU accumulation. The two heads are
    fused into one (h2, 2L) matmul; mean columns [:L] pass through, log_var
    columns [L:] become std = exp(0.5 * log_var).
    """
    # hidden layer 1: Linear + LeakyReLU(0.01)
    h = jnp.dot(x_ref[...].astype(jnp.bfloat16), w1_ref[...],
                preferred_element_type=jnp.float32) + b1_ref[...]
    h = jnp.maximum(h, 0.01 * h)

    # hidden layer 2: Linear + LeakyReLU(0.01)
    h = jnp.dot(h.astype(jnp.bfloat16), w2_ref[...],
                preferred_element_type=jnp.float32) + b2_ref[...]
    h = jnp.maximum(h, 0.01 * h)

    # fused heads: [mean | log_var] in one MXU push
    heads = jnp.dot(h.astype(jnp.bfloat16), wh_ref[...],
                    preferred_element_type=jnp.float32) + bh_ref[...]

    L = mean_ref.shape[-1]
    mean_ref[...] = heads[:, :L]
    std_ref[...] = jnp.exp(0.5 * heads[:, L:])


def prepare_params(params):
    """One-time parameter prep (hoisted out of the per-call path).

    Casts the matmul weights to bf16 and fuses the mean / log_var heads into a
    single (h2, 2L) weight and (1, 2L) bias.  Call once; reuse for every
    forward call.
    """
    return dict(
        w1=params["w1"].astype(jnp.bfloat16),
        b1=params["b1"].astype(jnp.float32),
        w2=params["w2"].astype(jnp.bfloat16),
        b2=params["b2"].astype(jnp.float32),
        wh=jnp.concatenate([params["wm"], params["wv"]], axis=1).astype(jnp.bfloat16),
        bh=jnp.concatenate([params["bm"], params["bv"]], axis=1).astype(jnp.float32),
    )


def _choose_tile(B, batch_tile):
    """Largest multiple-of-16 tile <= batch_tile that (when possible) still
    gives >= 2 grid steps so the parallel axis can be sharded across both v7x
    TensorCores."""
    tile = _round_up(min(batch_tile, _round_up(B, 16)), 16)
    if B > 16 and _round_up(B, tile) // tile < 2:
        tile = _round_up(-(-B // 2), 16)   # ceil(B/2), rounded up to 16
    return tile


def encoder_forward(x, prepared, *, batch_tile=2048):
    """Run the fused encoder Pallas kernel.

    x        : (B, input_size) float32
    prepared : output of prepare_params()
    returns  : (mean (B, L), std (B, L)) in float32
    """
    B, in_dim = x.shape
    h1 = prepared["w1"].shape[1]
    h2 = prepared["w2"].shape[1]
    L = prepared["wh"].shape[1] // 2

    tile = _choose_tile(B, batch_tile)
    B_pad = _round_up(B, tile)
    grid = (B_pad // tile,)

    if B_pad != B:
        # zero-pad so padded rows stay finite; they are sliced off below.
        x = jnp.pad(x, ((0, B_pad - B), (0, 0)))

    def full(shape):
        # Weights / biases: same full block at every grid step (resident in
        # VMEM).  At these sizes the copies are tiny; if hidden sizes grow to
        # multi-k x multi-k, tile the K axis with an "arbitrary" grid dim and
        # an f32 accumulator scratch instead.
        return pl.BlockSpec(shape, lambda i: (0, 0))

    in_specs = [
        pl.BlockSpec((tile, in_dim), lambda i: (i, 0)),   # x, tiled over batch
        full((in_dim, h1)), full((1, h1)),
        full((h1, h2)), full((1, h2)),
        full((h2, 2 * L)), full((1, 2 * L)),
    ]
    out_specs = (
        pl.BlockSpec((tile, L), lambda i: (i, 0)),        # mean
        pl.BlockSpec((tile, L), lambda i: (i, 0)),        # std
    )
    out_shape = (
        jax.ShapeDtypeStruct((B_pad, L), jnp.float32),
        jax.ShapeDtypeStruct((B_pad, L), jnp.float32),
    )

    flops = 2 * B_pad * (in_dim * h1 + h1 * h2 + h2 * 2 * L)
    bytes_accessed = (
        B_pad * in_dim * 4                                    # x (f32)
        + (prepared["w1"].size + prepared["w2"].size + prepared["wh"].size) * 2
        + (prepared["b1"].size + prepared["b2"].size + prepared["bh"].size) * 4
        + 2 * B_pad * L * 4)                                  # mean + std (f32)
    cost = pl.CostEstimate(flops=flops,
                           transcendentals=B_pad * L,
                           bytes_accessed=bytes_accessed)

    mean, std = pl.pallas_call(
        encoder_kernel,
        out_shape=out_shape,
        grid_spec=pl.GridSpec(
            grid=grid,
            in_specs=in_specs,
            out_specs=out_specs,
        ),
        compiler_params=pltpu.CompilerParams(
            dimension_semantics=("parallel",)),
        cost_estimate=cost,
    )(x,
      prepared["w1"], prepared["b1"],
      prepared["w2"], prepared["b2"],
      prepared["wh"], prepared["bh"])

    if B_pad != B:
        mean = mean[:B]
        std = std[:B]
    return mean, std


def init_params(key, input_size, hidden_sizes, latent_dim):
    """Deterministic parameter init (Kaiming-uniform-ish like torch default)."""
    assert len(hidden_sizes) == 2, "this script instantiates hidden_sizes of length 2"
    dims = [input_size] + hidden_sizes
    keys = jax.random.split(key, 8)

    def linear(kw, kb, fan_in, fan_out):
        bound = 1.0 / jnp.sqrt(fan_in)
        w = jax.random.uniform(kw, (fan_in, fan_out), jnp.float32, -bound, bound)
        b = jax.random.uniform(kb, (1, fan_out), jnp.float32, -bound, bound)
        return w, b

    w1, b1 = linear(keys[0], keys[1], dims[0], dims[1])
    w2, b2 = linear(keys[2], keys[3], dims[1], dims[2])
    wm, bm = linear(keys[4], keys[5], dims[2], latent_dim)
    wv, bv = linear(keys[6], keys[7], dims[2], latent_dim)
    return dict(w1=w1, b1=b1, w2=w2, b2=b2, wm=wm, bm=bm, wv=wv, bv=bv)


def reference_forward_f32(x, p):
    """Plain-JAX f32 reference mirroring the PyTorch forward."""
    h = x @ p["w1"] + p["b1"]
    h = jnp.where(h > 0, h, 0.01 * h)
    h = h @ p["w2"] + p["b2"]
    h = jnp.where(h > 0, h, 0.01 * h)
    mean = h @ p["wm"] + p["bm"]
    log_var = h @ p["wv"] + p["bv"]
    return mean, jnp.sqrt(jnp.exp(log_var))


def reference_forward_bf16(x, p):
    """Reference that mirrors the kernel numerics (bf16 operands, f32 accum)."""
    def mm(a, w):
        return jnp.dot(a.astype(jnp.bfloat16), w.astype(jnp.bfloat16),
                       preferred_element_type=jnp.float32)
    h = mm(x, p["w1"]) + p["b1"]
    h = jnp.where(h > 0, h, 0.01 * h)
    h = mm(h, p["w2"]) + p["b2"]
    h = jnp.where(h > 0, h, 0.01 * h)
    mean = mm(h, p["wm"]) + p["bm"]
    log_var = mm(h, p["wv"]) + p["bv"]
    return mean, jnp.exp(0.5 * log_var)


if __name__ == "__main__":
    key = jax.random.PRNGKey(0)
    k_x, k_p = jax.random.split(key)

    batch = 16
    input_size = 32
    hidden_sizes = [64, 32]
    latent_dim = 16

    x = jax.random.normal(k_x, (batch, input_size), jnp.float32)
    params = init_params(k_p, input_size, hidden_sizes, latent_dim)
    prepared = prepare_params(params)   # one-time weight prep (bf16 cast + head fuse)

    mean, std = encoder_forward(x, prepared)
    jax.block_until_ready((mean, std))

    # Tight check against a reference with the same bf16-operand / f32-accum numerics.
    rm, rs = reference_forward_bf16(x, params)
    assert jnp.allclose(mean, rm, atol=2e-3, rtol=2e-3)
    assert jnp.allclose(std, rs, atol=2e-3, rtol=2e-3)

    # Loose sanity check against the full-f32 (PyTorch-equivalent) forward.
    fm, fs = reference_forward_f32(x, params)
    assert jnp.allclose(mean, fm, atol=1e-1, rtol=1e-1)
    assert jnp.allclose(std, fs, atol=1e-1, rtol=1e-1)

    # Also exercise a batch that is not a multiple of the tile (padding path,
    # multi-step parallel grid).
    x2 = jax.random.normal(k_x, (1000, input_size), jnp.float32)
    m2, s2 = encoder_forward(x2, prepared, batch_tile=2048)
    jax.block_until_ready((m2, s2))
    rm2, rs2 = reference_forward_bf16(x2, params)
    assert m2.shape == (1000, latent_dim) and s2.shape == (1000, latent_dim)
    assert jnp.allclose(m2, rm2, atol=2e-3, rtol=2e-3)
    assert jnp.allclose(s2, rs2, atol=2e-3, rtol=2e-3)

    print("KERNEL_OK")
</pallas_src>

<mosaic_0001>
module attributes {stable_mosaic.version = 11 : i64} {
  func.func @encoder_kernel(%arg0: i32, %arg1: memref<16x32xf32, #tpu.memory_space<vmem>>, %arg2: memref<32x64xbf16, #tpu.memory_space<vmem>>, %arg3: memref<1x64xf32, #tpu.memory_space<vmem>>, %arg4: memref<64x32xbf16, #tpu.memory_space<vmem>>, %arg5: memref<1x32xf32, #tpu.memory_space<vmem>>, %arg6: memref<32x32xbf16, #tpu.memory_space<vmem>>, %arg7: memref<1x32xf32, #tpu.memory_space<vmem>>, %arg8: memref<16x16xf32, #tpu.memory_space<vmem>>, %arg9: memref<16x16xf32, #tpu.memory_space<vmem>>) attributes {dimension_semantics = [#tpu.dimension_semantics<parallel>], iteration_bounds = array<i64: 1>, scalar_prefetch = 0 : i64, scratch_operands = 0 : i64, tpu.core_type = #tpu.core_type<tc>, window_params = [{transform_indices = @transform_0, window_bounds = array<i64: 16, 32>}, {pipeline_mode = #tpu.pipeline_mode<synchronous>, transform_indices = @transform_1, window_bounds = array<i64: 32, 64>}, {pipeline_mode = #tpu.pipeline_mode<synchronous>, transform_indices = @transform_2, window_bounds = array<i64: 1, 64>}, {pipeline_mode = #tpu.pipeline_mode<synchronous>, transform_indices = @transform_3, window_bounds = array<i64: 64, 32>}, {pipeline_mode = #tpu.pipeline_mode<synchronous>, transform_indices = @transform_4, window_bounds = array<i64: 1, 32>}, {pipeline_mode = #tpu.pipeline_mode<synchronous>, transform_indices = @transform_5, window_bounds = array<i64: 32, 32>}, {pipeline_mode = #tpu.pipeline_mode<synchronous>, transform_indices = @transform_6, window_bounds = array<i64: 1, 32>}, {transform_indices = @transform_7, window_bounds = array<i64: 16, 16>}, {transform_indices = @transform_8, window_bounds = array<i64: 16, 16>}]} {
    %c0 = arith.constant 0 : index
    %c0_0 = arith.constant 0 : index
    %0 = vector.load %arg1[%c0, %c0_0] : memref<16x32xf32, #tpu.memory_space<vmem>>, vector<16x32xf32>
    %1 = arith.truncf %0 : vector<16x32xf32> to vector<16x32xbf16>
    %c0_1 = arith.constant 0 : index
    %c0_2 = arith.constant 0 : index
    %2 = vector.load %arg2[%c0_1, %c0_2] : memref<32x64xbf16, #tpu.memory_space<vmem>>, vector<32x64xbf16>
    %cst = arith.constant dense<0.000000e+00> : vector<16x64xf32>
    %3 = tpu.matmul %1, %2, %cst {dimension_numbers = #tpu.dot_dimension_numbers<[1], [0], [0], [1], [0, 0, 1, 1], [], []>} : vector<16x32xbf16>, vector<32x64xbf16>, vector<16x64xf32> -> vector<16x64xf32>
    %c0_3 = arith.constant 0 : index
    %c0_4 = arith.constant 0 : index
    %4 = vector.load %arg3[%c0_3, %c0_4] : memref<1x64xf32, #tpu.memory_space<vmem>>, vector<1x64xf32>
    %5 = vector.broadcast %4 : vector<1x64xf32> to vector<16x64xf32>
    %6 = arith.addf %3, %5 : vector<16x64xf32>
    %cst_5 = arith.constant 0.00999999977 : f32
    %7 = vector.broadcast %cst_5 : f32 to vector<16x64xf32>
    %8 = arith.mulf %7, %6 : vector<16x64xf32>
    %9 = arith.maximumf %6, %8 : vector<16x64xf32>
    %10 = arith.truncf %9 : vector<16x64xf32> to vector<16x64xbf16>
    %c0_6 = arith.constant 0 : index
    %c0_7 = arith.constant 0 : index
    %11 = vector.load %arg4[%c0_6, %c0_7] : memref<64x32xbf16, #tpu.memory_space<vmem>>, vector<64x32xbf16>
    %cst_8 = arith.constant dense<0.000000e+00> : vector<16x32xf32>
    %12 = tpu.matmul %10, %11, %cst_8 {dimension_numbers = #tpu.dot_dimension_numbers<[1], [0], [0], [1], [0, 0, 1, 1], [], []>} : vector<16x64xbf16>, vector<64x32xbf16>, vector<16x32xf32> -> vector<16x32xf32>
    %c0_9 = arith.constant 0 : index
    %c0_10 = arith.constant 0 : index
    %13 = vector.load %arg5[%c0_9, %c0_10] : memref<1x32xf32, #tpu.memory_space<vmem>>, vector<1x32xf32>
    %14 = vector.broadcast %13 : vector<1x32xf32> to vector<16x32xf32>
    %15 = arith.addf %12, %14 : vector<16x32xf32>
    %cst_11 = arith.constant 0.00999999977 : f32
    %16 = vector.broadcast %cst_11 : f32 to vector<16x32xf32>
    %17 = arith.mulf %16, %15 : vector<16x32xf32>
    %18 = arith.maximumf %15, %17 : vector<16x32xf32>
    %19 = arith.truncf %18 : vector<16x32xf32> to vector<16x32xbf16>
    %c0_12 = arith.constant 0 : index
    %c0_13 = arith.constant 0 : index
    %20 = vector.load %arg6[%c0_12, %c0_13] : memref<32x32xbf16, #tpu.memory_space<vmem>>, vector<32x32xbf16>
    %cst_14 = arith.constant dense<0.000000e+00> : vector<16x32xf32>
    %21 = tpu.matmul %19, %20, %cst_14 {dimension_numbers = #tpu.dot_dimension_numbers<[1], [0], [0], [1], [0, 0, 1, 1], [], []>} : vector<16x32xbf16>, vector<32x32xbf16>, vector<16x32xf32> -> vector<16x32xf32>
    %c0_15 = arith.constant 0 : index
    %c0_16 = arith.constant 0 : index
    %22 = vector.load %arg7[%c0_15, %c0_16] : memref<1x32xf32, #tpu.memory_space<vmem>>, vector<1x32xf32>
    %23 = vector.broadcast %22 : vector<1x32xf32> to vector<16x32xf32>
    %24 = arith.addf %21, %23 : vector<16x32xf32>
    %25 = vector.extract_strided_slice %24 {offsets = [0, 0], sizes = [16, 16], strides = [1, 1]} : vector<16x32xf32> to vector<16x16xf32>
    %c0_17 = arith.constant 0 : index
    %c0_18 = arith.constant 0 : index
    %26 = vector.load %arg8[%c0_17, %c0_18] : memref<16x16xf32, #tpu.memory_space<vmem>>, vector<16x16xf32>
    tpu.vector_store %arg8[%c0_17, %c0_18], %25 {strides = array<i32>} : memref<16x16xf32, #tpu.memory_space<vmem>>, vector<16x16xf32>,
    %27 = vector.extract_strided_slice %24 {offsets = [0, 16], sizes = [16, 16], strides = [1, 1]} : vector<16x32xf32> to vector<16x16xf32>
    %cst_19 = arith.constant 5.000000e-01 : f32
    %28 = vector.broadcast %cst_19 : f32 to vector<16x16xf32>
    %29 = arith.mulf %28, %27 : vector<16x16xf32>
    %30 = math.exp %29 : vector<16x16xf32>
    %c0_20 = arith.constant 0 : index
    %c0_21 = arith.constant 0 : index
    %31 = vector.load %arg9[%c0_20, %c0_21] : memref<16x16xf32, #tpu.memory_space<vmem>>, vector<16x16xf32>
    tpu.vector_store %arg9[%c0_20, %c0_21], %30 {strides = array<i32>} : memref<16x16xf32, #tpu.memory_space<vmem>>, vector<16x16xf32>,
    return
  }
  func.func @transform_0(%arg0: i32) -> (i32, i32) {
    %c0_i32 = arith.constant 0 : i32
    %c0_i32_0 = arith.constant 0 : i32
    return %arg0, %c0_i32 : i32, i32
  }
  func.func @transform_1(%arg0: i32) -> (i32, i32) {
    %c0_i32 = arith.constant 0 : i32
    %c0_i32_0 = arith.constant 0 : i32
    %c0_i32_1 = arith.constant 0 : i32
    return %c0_i32, %c0_i32_0 : i32, i32
  }
  func.func @transform_2(%arg0: i32) -> (i32, i32) {
    %c0_i32 = arith.constant 0 : i32
    %c0_i32_0 = arith.constant 0 : i32
    %c0_i32_1 = arith.constant 0 : i32
    return %c0_i32, %c0_i32_0 : i32, i32
  }
  func.func @transform_3(%arg0: i32) -> (i32, i32) {
    %c0_i32 = arith.constant 0 : i32
    %c0_i32_0 = arith.constant 0 : i32
    %c0_i32_1 = arith.constant 0 : i32
    return %c0_i32, %c0_i32_0 : i32, i32
  }
  func.func @transform_4(%arg0: i32) -> (i32, i32) {
    %c0_i32 = arith.constant 0 : i32
    %c0_i32_0 = arith.constant 0 : i32
    %c0_i32_1 = arith.constant 0 : i32
    return %c0_i32, %c0_i32_0 : i32, i32
  }
  func.func @transform_5(%arg0: i32) -> (i32, i32) {
    %c0_i32 = arith.constant 0 : i32
    %c0_i32_0 = arith.constant 0 : i32
    %c0_i32_1 = arith.constant 0 : i32
    return %c0_i32, %c0_i32_0 : i32, i32
  }
  func.func @transform_6(%arg0: i32) -> (i32, i32) {
    %c0_i32 = arith.constant 0 : i32
    %c0_i32_0 = arith.constant 0 : i32
    %c0_i32_1 = arith.constant 0 : i32
    return %c0_i32, %c0_i32_0 : i32, i32
  }
  func.func @transform_7(%arg0: i32) -> (i32, i32) {
    %c0_i32 = arith.constant 0 : i32
    %c0_i32_0 = arith.constant 0 : i32
    return %arg0, %c0_i32 : i32, i32
  }
  func.func @transform_8(%arg0: i32) -> (i32, i32) {
    %c0_i32 = arith.constant 0 : i32
    %c0_i32_0 = arith.constant 0 : i32
    return %arg0, %c0_i32 : i32, i32
  }
}

</mosaic_0001>

<llo_original>
// kernel: tpu_custom_call.1
$region0: #{tpu_custom_call.1}
  #allocation0 [shape = 'u32[]', space=smem, size = 0x4, offset = 0x4, fixed_abs, tag = 'smem constant byte address 0x4 - core index']
  #allocation1 [shape = 'u32[144,128]{1,0:T(1,128)}', space=vmem, size = 0x12000, scoped, tag = 'internal scratch']
  %s0 = inlined_call_operand.vmem [shape: f32[16,32], index: 0, kind: input, shape index: {}]
  %s1 = inlined_call_operand.vmem [shape: bf16[32,64], index: 1, kind: input, shape index: {}]
  %s2 = inlined_call_operand.vmem [shape: f32[1,64], index: 2, kind: input, shape index: {}]
  %s3 = inlined_call_operand.vmem [shape: bf16[64,32], index: 3, kind: input, shape index: {}]
  %s4 = inlined_call_operand.vmem [shape: f32[1,32], index: 4, kind: input, shape index: {}]
  %s5 = inlined_call_operand.vmem [shape: bf16[32,32], index: 5, kind: input, shape index: {}]
  %s6 = inlined_call_operand.vmem [shape: f32[1,32], index: 6, kind: input, shape index: {}]
  %s7 = inlined_call_operand.hbm [shape: f32[16,16], index: 7, kind: output, shape index: {0}]
  %s8 = inlined_call_operand.hbm [shape: f32[16,16], index: 8, kind: output, shape index: {1}]
  %9 = xla_tuple %s7, %s8
  %s10 = sld [smem:[#allocation0]]
  $region46: #{tpu_custom_call.1} parent=0
    _
  %s12 = ssub.s32 1, %s10
  %s13 = scalar_select 0, %s12, %s10
  $region1: #{tpu_custom_call.1} parent=0
    #allocation2 [shape = 'u8[8192]{0}', space=vmem, size = 0x2000, scoped, tag = 'output window, operand 0, single buffered']
    #allocation3 [shape = 's32[1]{0}', space=sflag, size = 0x4, scoped, tag = 'scoped memory for tpu_custom_call.1']
    #allocation4 [shape = 'u8[8192]{0}', space=vmem, size = 0x2000, scoped, tag = 'output window, operand 1, single buffered']
    #allocation5 [shape = 's32[1]{0}', space=sflag, size = 0x4, scoped, tag = 'scoped memory for tpu_custom_call.1']
    %14 = vsyncpa [#allocation3], 0
    %15 = vsyncpa [#allocation5], 0
    // Predicated region
    $region2: #{tpu_custom_call.1} parent=1 // pred_check
      _
    $region3: #{tpu_custom_call.1} parent=1 // pred_check_branch
      %17 = sbr.rel (0) target = $region5
    $region4: #{tpu_custom_call.1} parent=1 // pred_region
      _
    $region5: #{tpu_custom_call.1} parent=1 // pred_fallthru
      _
    // Predicated region
    $region6: #{tpu_custom_call.1} parent=1 // pred_check
      _
    $region7: #{tpu_custom_call.1} parent=1 // pred_check_branch
      %19 = sbr.rel (0) target = $region9
    $region8: #{tpu_custom_call.1} parent=1 // pred_region
      _
    $region9: #{tpu_custom_call.1} parent=1 // pred_fallthru
      _
    // Predicated region
    $region10: #{tpu_custom_call.1} parent=1 // pred_check
      _
    $region11: #{tpu_custom_call.1} parent=1 // pred_check_branch
      %21 = sbr.rel (0) target = $region13
    $region12: #{tpu_custom_call.1} parent=1 // pred_region
      _
    $region13: #{tpu_custom_call.1} parent=1 // pred_fallthru
      _
    // Predicated region
    $region14: #{tpu_custom_call.1} parent=1 // pred_check
      _
    $region15: #{tpu_custom_call.1} parent=1 // pred_check_branch
      %23 = sbr.rel (0) target = $region17
    $region16: #{tpu_custom_call.1} parent=1 // pred_region
      _
    $region17: #{tpu_custom_call.1} parent=1 // pred_fallthru
      _
    // Predicated region
    $region18: #{tpu_custom_call.1} parent=1 // pred_check
      _
    $region19: #{tpu_custom_call.1} parent=1 // pred_check_branch
      %25 = sbr.rel (0) target = $region21
    $region20: #{tpu_custom_call.1} parent=1 // pred_region
      _
    $region21: #{tpu_custom_call.1} parent=1 // pred_fallthru
      _
    // Predicated region
    $region22: #{tpu_custom_call.1} parent=1 // pred_check
      _
    $region23: #{tpu_custom_call.1} parent=1 // pred_check_branch
      %27 = sbr.rel (0) target = $region25
    $region24: #{tpu_custom_call.1} parent=1 // pred_region
      _
    $region25: #{tpu_custom_call.1} parent=1 // pred_fallthru
      _
    // Predicated region
    $region26: #{tpu_custom_call.1} parent=1 // pred_check
      _
    $region27: #{tpu_custom_call.1} parent=1 // pred_check_branch
      %29 = sbr.rel (0) target = $region29
    $region28: #{tpu_custom_call.1} parent=1 // pred_region
      _
    $region29: #{tpu_custom_call.1} parent=1 // pred_fallthru
      _
    %v31 = vld [vmem:[%s0] sm:$0xff]
    %v32 = vld [vmem:[%s0 + $0x8] sm:$0xff]
    %v33 = vpack.c.bf16 %v32, %v31
    %v34 = vld [vmem:[%s1] sm:$0xf]
    %v35 = vld [vmem:[%s1 + $0x4] sm:$0xf]
    %v36 = vld [vmem:[%s1 + $0x8] sm:$0xf]
    %v37 = vld [vmem:[%s1 + $0xc] sm:$0xf]
    %v38 = vld [vmem:[%s2] sm:$0x1]
    %v40 = vlaneseq
    %v41 = vshrl.u32 %v40, 7
    %v42 = vsub.s32 0, %v41
    %v43 = vrot.slane %v38, %v42
    %v49 = vunpack.c.l.b16 %v34
    %v50 = vunpack.c.l.b16 %v35
    %v51 = vunpack.c.l.b16 %v36
    %v52 = vunpack.c.l.b16 %v37
    %v53 = vpack.c.b16 %v50, %v49
    %v54 = vpack.c.b16 %v52, %v51
    %vm57 = vcmask 261120
    %v59 = vsel %vm57, %v33, 0
    %61 = vmatprep.subr.bf16.mxu0 0
    %62 = vmatpush1.bf16.msra.mxu0 %v53
    %63 = vmatprep.subr.bf16.mxu0 0
    %64 = vmatpush1.bf16.msra.mxu0 %v54
    %65 = vmatprep.subr.bf16.mxu0 0
    %66 = vmatpush1.bf16.msra.mxu0 0
    %67 = vmatprep.subr.bf16.mxu0 0
    %68 = vmatpush1.bf16.msra.mxu0 0
    %69 = vmatprep.subr.bf16.mxu0 0
    %70 = vmatpush1.bf16.msra.mxu0 0
    %71 = vmatprep.subr.bf16.mxu0 0
    %72 = vmatpush1.bf16.msra.mxu0 0
    %73 = vmatprep.subr.bf16.mxu0 0
    %74 = vmatpush1.bf16.msra.mxu0 0
    %75 = vmatprep.subr.bf16.mxu0 0
    %76 = vmatpush1.bf16.msra.mxu0 0
    %77 = vmatprep.subr.bf16.mxu0 0
    %78 = vmatpush1.bf16.msra.mxu0 0
    %79 = vmatprep.subr.bf16.mxu0 0
    %80 = vmatpush1.bf16.msra.mxu0 0
    %81 = vmatprep.subr.bf16.mxu0 0
    %82 = vmatpush1.bf16.msra.mxu0 0
    %83 = vmatprep.subr.bf16.mxu0 0
    %84 = vmatpush1.bf16.msra.mxu0 0
    %85 = vmatprep.subr.bf16.mxu0 0
    %86 = vmatpush1.bf16.msra.mxu0 0
    %87 = vmatprep.subr.bf16.mxu0 0
    %88 = vmatpush1.bf16.msra.mxu0 0
    %89 = vmatprep.subr.bf16.mxu0 0
    %90 = vmatpush1.bf16.msra.mxu0 0
    %91 = vmatprep.subr.bf16.mxu0 0
    %92 = vmatpush1.bf16.msra.mxu0 0
    %93 = vmatprep.mubr.bf16.mxu0 0
    %94 = vmatmul.mubr.bf16.gmra.mrb[0].mxu0 %v59
    %v95 = vpop.f32.mrb[0].mxu0
    %v96 = vadd.f32 %v43, %v95
    %v97 = vpop.f32.mrb[0].mxu0
    %v98 = vpop.f32.mrb[0].mxu0
    %v99 = vadd.f32 %v43, %v98
    %v100 = vpop.f32.mrb[0].mxu0
    %101 = vdwg.mxu0
    %v102 = vmul.f32 %v96, 0.01
    %v103 = vmul.f32 %v99, 0.01
    %v104 = vmax.f32 %v96, %v102
    %v105 = vmax.f32 %v99, %v103
    %v106 = vpack.c.bf16 %v105, %v104
    %v107 = vld [vmem:[%s3] sm:$0xf]
    %v108 = vld [vmem:[%s3 + $0x4] sm:$0xf]
    %v109 = vld [vmem:[%s3 + $0x8] sm:$0xf]
    %v110 = vld [vmem:[%s3 + $0xc] sm:$0xf]
    %v111 = vld [vmem:[%s3 + $0x10] sm:$0xf]
    %v112 = vld [vmem:[%s3 + $0x14] sm:$0xf]
    %v113 = vld [vmem:[%s3 + $0x18] sm:$0xf]
    %v114 = vld [vmem:[%s3 + $0x1c] sm:$0xf]
    %v115 = vld [vmem:[%s4] sm:$0x1]
    %v117 = vlaneseq
    %v118 = vshrl.u32 %v117, 7
    %v119 = vsub.s32 0, %v118
    %v120 = vrot.slane %v115, %v119
    %v130 = vunpack.c.l.b16 %v107
    %v131 = vunpack.c.l.b16 %v108
    %v132 = vunpack.c.l.b16 %v109
    %v133 = vunpack.c.l.b16 %v110
    %v134 = vunpack.c.l.b16 %v111
    %v135 = vunpack.c.l.b16 %v112
    %v136 = vunpack.c.l.b16 %v113
    %v137 = vunpack.c.l.b16 %v114
    %v138 = vpack.c.b16 %v131, %v130
    %v139 = vpack.c.b16 %v133, %v132
    %v140 = vpack.c.b16 %v135, %v134
    %v141 = vpack.c.b16 %v137, %v136
    %vm146 = vcmask 523264
    %v148 = vsel %vm146, %v106, 0
    %150 = vmatprep.subr.bf16.mxu0 0
    %151 = vmatpush1.bf16.msra.mxu0 %v138
    %152 = vmatprep.subr.bf16.mxu0 0
    %153 = vmatpush1.bf16.msra.mxu0 %v139
    %154 = vmatprep.subr.bf16.mxu0 0
    %155 = vmatpush1.bf16.msra.mxu0 %v140
    %156 = vmatprep.subr.bf16.mxu0 0
    %157 = vmatpush1.bf16.msra.mxu0 %v141
    %158 = vmatprep.subr.bf16.mxu0 0
    %159 = vmatpush1.bf16.msra.mxu0 0
    %160 = vmatprep.subr.bf16.mxu0 0
    %161 = vmatpush1.bf16.msra.mxu0 0
    %162 = vmatprep.subr.bf16.mxu0 0
    %163 = vmatpush1.bf16.msra.mxu0 0
    %164 = vmatprep.subr.bf16.mxu0 0
    %165 = vmatpush1.bf16.msra.mxu0 0
    %166 = vmatprep.subr.bf16.mxu0 0
    %167 = vmatpush1.bf16.msra.mxu0 0
    %168 = vmatprep.subr.bf16.mxu0 0
    %169 = vmatpush1.bf16.msra.mxu0 0
    %170 = vmatprep.subr.bf16.mxu0 0
    %171 = vmatpush1.bf16.msra.mxu0 0
    %172 = vmatprep.subr.bf16.mxu0 0
    %173 = vmatpush1.bf16.msra.mxu0 0
    %174 = vmatprep.subr.bf16.mxu0 0
    %175 = vmatpush1.bf16.msra.mxu0 0
    %176 = vmatprep.subr.bf16.mxu0 0
    %177 = vmatpush1.bf16.msra.mxu0 0
    %178 = vmatprep.subr.bf16.mxu0 0
    %179 = vmatpush1.bf16.msra.mxu0 0
    %180 = vmatprep.subr.bf16.mxu0 0
    %181 = vmatpush1.bf16.msra.mxu0 0
    %182 = vmatprep.mubr.bf16.mxu0 0
    %183 = vmatmul.mubr.bf16.gmra.mrb[0].mxu0 %v148
    %v184 = vpop.f32.mrb[0].mxu0
    %v185 = vadd.f32 %v120, %v184
    %v186 = vpop.f32.mrb[0].mxu0
    %v187 = vpop.f32.mrb[0].mxu0
    %v188 = vadd.f32 %v120, %v187
    %v189 = vpop.f32.mrb[0].mxu0
    %190 = vdwg.mxu0
    %v191 = vmul.f32 %v185, 0.01
    %v192 = vmul.f32 %v188, 0.01
    %v193 = vmax.f32 %v185, %v191
    %v194 = vmax.f32 %v188, %v192
    %v195 = vpack.c.bf16 %v194, %v193
    %v196 = vld [vmem:[%s5] sm:$0xf]
    %v197 = vld [vmem:[%s5 + $0x4] sm:$0xf]
    %v198 = vld [vmem:[%s5 + $0x8] sm:$0xf]
    %v199 = vld [vmem:[%s5 + $0xc] sm:$0xf]
    %v200 = vld [vmem:[%s6] sm:$0x1]
    %v202 = vlaneseq
    %v203 = vshrl.u32 %v202, 7
    %v204 = vsub.s32 0, %v203
    %v205 = vrot.slane %v200, %v204
    %v211 = vunpack.c.l.b16 %v196
    %v212 = vunpack.c.l.b16 %v197
    %v213 = vunpack.c.l.b16 %v198
    %v214 = vunpack.c.l.b16 %v199
    %v215 = vpack.c.b16 %v212, %v211
    %v216 = vpack.c.b16 %v214, %v213
    %v220 = vsel %vm57, %v195, 0
    %222 = vmatprep.subr.bf16.mxu0 0
    %223 = vmatpush1.bf16.msra.mxu0 %v215
    %224 = vmatprep.subr.bf16.mxu0 0
    %225 = vmatpush1.bf16.msra.mxu0 %v216
    %226 = vmatprep.subr.bf16.mxu0 0
    %227 = vmatpush1.bf16.msra.mxu0 0
    %228 = vmatprep.subr.bf16.mxu0 0
    %229 = vmatpush1.bf16.msra.mxu0 0
    %230 = vmatprep.subr.bf16.mxu0 0
    %231 = vmatpush1.bf16.msra.mxu0 0
    %232 = vmatprep.subr.bf16.mxu0 0
    %233 = vmatpush1.bf16.msra.mxu0 0
    %234 = vmatprep.subr.bf16.mxu0 0
    %235 = vmatpush1.bf16.msra.mxu0 0
    %236 = vmatprep.subr.bf16.mxu0 0
    %237 = vmatpush1.bf16.msra.mxu0 0
    %238 = vmatprep.subr.bf16.mxu0 0
    %239 = vmatpush1.bf16.msra.mxu0 0
    %240 = vmatprep.subr.bf16.mxu0 0
    %241 = vmatpush1.bf16.msra.mxu0 0
    %242 = vmatprep.subr.bf16.mxu0 0
    %243 = vmatpush1.bf16.msra.mxu0 0
    %244 = vmatprep.subr.bf16.mxu0 0
    %245 = vmatpush1.bf16.msra.mxu0 0
    %246 = vmatprep.subr.bf16.mxu0 0
    %247 = vmatpush1.bf16.msra.mxu0 0
    %248 = vmatprep.subr.bf16.mxu0 0
    %249 = vmatpush1.bf16.msra.mxu0 0
    %250 = vmatprep.subr.bf16.mxu0 0
    %251 = vmatpush1.bf16.msra.mxu0 0
    %252 = vmatprep.subr.bf16.mxu0 0
    %253 = vmatpush1.bf16.msra.mxu0 0
    %254 = vmatprep.mubr.bf16.mxu0 0
    %255 = vmatmul.mubr.bf16.gmra.mrb[0].mxu0 %v220
    %v256 = vpop.f32.mrb[0].mxu0
    %v257 = vadd.f32 %v205, %v256
    %v258 = vpop.f32.mrb[0].mxu0
    %v259 = vpop.f32.mrb[0].mxu0
    %v260 = vadd.f32 %v205, %v259
    %v261 = vpop.f32.mrb[0].mxu0
    %262 = vdwg.mxu0
    %vm263 = vcmask 130048
    %264 = vst.msk [vmem:[#allocation2] sm:$0xff] %vm263, %v257
    %265 = vst.msk [vmem:[#allocation2 + $0x8] sm:$0xff] %vm263, %v260
    %v266 = vmul.f32 %v257, 0.5
    %v267 = vmul.f32 %v260, 0.5
    %v268 = vmul.f32 %v266, 1.442695
    %v269 = vpow.pop %v268
    %v270 = vmul.f32 %v267, 1.442695
    %v271 = vpow.pop %v270
    %274 = vrot.lane.b32.xlu0 %v269, 112
    %v275 = vpop.permute.xlu0 %274
    %276 = vrot.lane.b32.xlu0 %v271, 112
    %v277 = vpop.permute.xlu0 %276
    %280 = vst.msk [vmem:[#allocation4] sm:$0xff] %vm263, %v275
    %281 = vst.msk [vmem:[#allocation4 + $0x8] sm:$0xff] %vm263, %v277
    // Predicated region
    $region30: #{tpu_custom_call.1} parent=1 // pred_check
      _
    $region31: #{tpu_custom_call.1} parent=1 // pred_check_branch
      %283 = sbr.rel (0) target = $region33
    $region32: #{tpu_custom_call.1} parent=1 // pred_region
      %s285 = ssub.s32 256, 256
      %286 = vsyncadd [#allocation3], %s285
      %s287 = sshll.u32 [#allocation2], 4
      %s288 = int_to_ptr.vmem [resolvable:$true] %s287
      %293 = dma.vmem_to_hbm [thread:$0]  %s288, 256, %s7, [#allocation3], 128, 128, 8
    $region33: #{tpu_custom_call.1} parent=1 // pred_fallthru
      _
    // Predicated region
    $region34: #{tpu_custom_call.1} parent=1 // pred_check
      _
    $region35: #{tpu_custom_call.1} parent=1 // pred_check_branch
      %295 = sbr.rel (0) target = $region37
    $region36: #{tpu_custom_call.1} parent=1 // pred_region
      %s297 = ssub.s32 256, 256
      %298 = vsyncadd [#allocation5], %s297
      %s299 = sshll.u32 [#allocation4], 4
      %s300 = int_to_ptr.vmem [resolvable:$true] %s299
      %305 = dma.vmem_to_hbm [thread:$0]  %s300, 256, %s8, [#allocation5], 128, 128, 8
    $region37: #{tpu_custom_call.1} parent=1 // pred_fallthru
      _
    // Predicated region
    $region38: #{tpu_custom_call.1} parent=1 // pred_check
      _
    $region39: #{tpu_custom_call.1} parent=1 // pred_check_branch
      %307 = sbr.rel (0) target = $region41
    $region40: #{tpu_custom_call.1} parent=1 // pred_region
      %308 = dma.done [#allocation3], 256
    $region41: #{tpu_custom_call.1} parent=1 // pred_fallthru
      _
    // Predicated region
    $region42: #{tpu_custom_call.1} parent=1 // pred_check
      _
    $region43: #{tpu_custom_call.1} parent=1 // pred_check_branch
      %310 = sbr.rel (0) target = $region45
    $region44: #{tpu_custom_call.1} parent=1 // pred_region
      %311 = dma.done [#allocation5], 256
    $region45: #{tpu_custom_call.1} parent=1 // pred_fallthru
      _
    %312 = vsyncpa [#allocation3], 1
    %313 = vsyncpa [#allocation5], 1

</llo_original>
